<compile_context>
chip_gen: v6e
topology: v6e:2x2x1
jax: 0.10.0
libtpu: 0.0.40
codegen_flags: <defaults>
</compile_context>

<pallas_src>
import jax
import jax.numpy as jnp
from jax import lax
from jax.experimental import pallas as pl
from jax.experimental.pallas import tpu as pltpu


# ----------------------------- Pallas kernels ------------------------------

def _stats_kernel(x_ref, cov_ref, colsum_ref):
    """Accumulate raw second-moment matrix and per-feature column sums.

    Grid: (b, h_tiles) -- both reduction axes.  cov_ref / colsum_ref use a
    constant output block index so they stay resident in VMEM and act as
    fp32 accumulators across the whole grid (init at step 0, written back
    once at the end).
    """
    @pl.when((pl.program_id(0) == 0) & (pl.program_id(1) == 0))
    def _():
        cov_ref[...] = jnp.zeros_like(cov_ref)
        colsum_ref[...] = jnp.zeros_like(colsum_ref)

    x = x_ref[0]                                   # (s, th), input dtype
    # X @ X^T contracting over the lane axis h: no explicit transpose, MXU is
    # fed the input dtype (bf16 stays bf16), accumulation in fp32.
    cov_ref[...] += lax.dot_general(
        x, x,
        dimension_numbers=(((1,), (1,)), ((), ())),
        preferred_element_type=jnp.float32)
    colsum_ref[...] += jnp.sum(x.astype(jnp.float32), axis=-1, keepdims=True)


def _project_kernel(x_ref, vkt_ref, off_ref, out_ref):
    """out[b] = Vk^T @ X[b] - Vk^T mu  (centering folded into a (k,1) offset).

    Output is written directly in (b, k, h) layout -> lane-dense stores on h.
    """
    p = jnp.dot(vkt_ref[...], x_ref[0], preferred_element_type=jnp.float32)
    out_ref[0] = (p - off_ref[...]).astype(out_ref.dtype)


# ------------------------------ wrappers ------------------------------------

def _pick_h_tile(h, target=512):
    """Largest multiple-of-128 divisor of h that is <= target (else full h)."""
    if h <= target or h % 128 != 0:
        return h
    for t in range(target, 0, -128):
        if h % t == 0:
            return t
    return h


def _stats(x, th):
    b, s, h = x.shape
    n_h = h // th
    return pl.pallas_call(
        _stats_kernel,
        grid=(b, n_h),
        in_specs=[pl.BlockSpec((1, s, th), lambda bi, hi: (bi, 0, hi))],
        out_specs=(
            pl.BlockSpec((s, s), lambda bi, hi: (0, 0)),
            pl.BlockSpec((s, 1), lambda bi, hi: (0, 0)),
        ),
        out_shape=(
            jax.ShapeDtypeStruct((s, s), jnp.float32),   # raw = sum X X^T
            jax.ShapeDtypeStruct((s, 1), jnp.float32),   # column sums
        ),
        compiler_params=pltpu.CompilerParams(
            dimension_semantics=("arbitrary", "arbitrary")),
    )(x)


def _project(x, vkt, off, th, out_dtype):
    b, s, h = x.shape
    k = vkt.shape[0]
    n_h = h // th
    return pl.pallas_call(
        _project_kernel,
        grid=(b, n_h),
        in_specs=[
            pl.BlockSpec((1, s, th), lambda bi, hi: (bi, 0, hi)),
            pl.BlockSpec((k, s), lambda bi, hi: (0, 0)),   # Vk^T, VMEM-resident
            pl.BlockSpec((k, 1), lambda bi, hi: (0, 0)),   # Vk^T mu offset
        ],
        out_specs=pl.BlockSpec((1, k, th), lambda bi, hi: (bi, 0, hi)),
        out_shape=jax.ShapeDtypeStruct((b, k, h), out_dtype),
        compiler_params=pltpu.CompilerParams(
            dimension_semantics=("parallel", "parallel")),
    )(x, vkt, off)


def pca_layer_forward(x, output_size):
    """PCALayer.forward: x (b, s, h) -> (b, output_size, h), same dtype."""
    b, s, h = x.shape
    in_dtype = x.dtype
    n = b * h                                       # number of PCA samples
    th = _pick_h_tile(h)

    # --- Pallas pass 1: raw second moment + column sums (single pass over x).
    raw, colsum = _stats(x, th)
    mean = colsum[:, 0] / n                         # (s,), fp32

    # One-pass centering of the covariance.  fp32 accumulation; note the usual
    # cancellation caveat when |mean| >> std (not the case for activations).
    cov = raw - n * jnp.outer(mean, mean)           # unnormalized: eigvecs unaffected

    # --- glue: symmetric eigendecomposition of the (s, s) covariance.
    # TODO(synk): eigh has no Pallas equivalent; done in XLA.
    evals, evecs = jnp.linalg.eigh(cov)             # ascending eigenvalues
    vk = evecs[:, -output_size:][:, ::-1]           # top-k components, (s, k)

    # Deterministic sign convention (PCA components are sign-ambiguous):
    # make the largest-|entry| of each component positive.
    max_idx = jnp.argmax(jnp.abs(vk), axis=0)
    signs = jnp.sign(vk[max_idx, jnp.arange(output_size)])
    signs = jnp.where(signs == 0, 1.0, signs)
    vk = vk * signs[None, :]

    vkt = vk.T.astype(in_dtype)                               # (k, s), MXU in input dtype
    off = (vk.T @ mean).reshape(output_size, 1).astype(jnp.float32)

    # --- Pallas pass 2: projection, emitted directly in (b, k, h) layout.
    return _project(x, vkt, off, th, in_dtype)


# ------------------------------ reference -----------------------------------

def _reference(x, k):
    """Pure-JAX reference mirroring the kernel math (sanity check only)."""
    b, s, h = x.shape
    n = b * h
    xf = x.astype(jnp.float32)
    mean = jnp.sum(xf, axis=(0, 2)) / n
    raw = jnp.einsum("bif,bjf->ij", xf, xf)
    cov = raw - n * jnp.outer(mean, mean)
    _, evecs = jnp.linalg.eigh(cov)
    vk = evecs[:, -k:][:, ::-1]
    idx = jnp.argmax(jnp.abs(vk), axis=0)
    sg = jnp.sign(vk[idx, jnp.arange(k)])
    sg = jnp.where(sg == 0, 1.0, sg)
    vk = vk * sg[None, :]
    xc = xf - mean[None, :, None]
    return jnp.einsum("ic,bij->bcj", vk, xc).astype(x.dtype)


# -------------------------------- main ---------------------------------------

if __name__ == "__main__":
    # small shapes consistent with the module: x is (batch, seq, hidden)
    b, s, h = 2, 8, 32
    output_size = 4

    key = jax.random.PRNGKey(0)
    x = jax.random.normal(key, (b, s, h), dtype=jnp.float32)

    out = jax.block_until_ready(pca_layer_forward(x, output_size))

    assert out.shape == (b, output_size, h), out.shape
    assert out.dtype == x.dtype
    assert bool(jnp.all(jnp.isfinite(out)))

    ref = _reference(x, output_size)
    assert bool(jnp.allclose(out, ref, atol=1e-3, rtol=1e-3)), (
        "max abs err = %g" % float(jnp.max(jnp.abs(out - ref))))

    print("KERNEL_OK")
</pallas_src>

<mosaic_0001>
module attributes {stable_mosaic.version = 11 : i64} {
  func.func @_stats_kernel(%arg0: i32, %arg1: i32, %arg2: memref<1x8x32xf32, #tpu.memory_space<vmem>>, %arg3: memref<8x8xf32, #tpu.memory_space<vmem>>, %arg4: memref<8x1xf32, #tpu.memory_space<vmem>>) attributes {dimension_semantics = [#tpu.dimension_semantics<arbitrary>, #tpu.dimension_semantics<arbitrary>], iteration_bounds = array<i64: 2, 1>, scalar_prefetch = 0 : i64, scratch_operands = 0 : i64, tpu.core_type = #tpu.core_type<tc>, window_params = [{transform_indices = @transform_0, window_bounds = array<i64: 1, 8, 32>}, {pipeline_mode = #tpu.pipeline_mode<synchronous>, transform_indices = @transform_1, window_bounds = array<i64: 8, 8>}, {pipeline_mode = #tpu.pipeline_mode<synchronous>, transform_indices = @transform_2, window_bounds = array<i64: 8, 1>}]} {
    %c0_i32 = arith.constant 0 : i32
    %0 = arith.cmpi eq, %arg0, %c0_i32 : i32
    %c0_i32_0 = arith.constant 0 : i32
    %1 = arith.cmpi eq, %arg1, %c0_i32_0 : i32
    %2 = arith.andi %0, %1 : i1
    %3 = arith.extui %2 : i1 to i32
    %c0_i32_1 = arith.constant 0 : i32
    %4 = arith.cmpi ne, %3, %c0_i32_1 : i32
    scf.if %4 {
      %cst_13 = arith.constant 0.000000e+00 : f32
      %16 = vector.broadcast %cst_13 : f32 to vector<8x8xf32>
      %c0_14 = arith.constant 0 : index
      %c0_15 = arith.constant 0 : index
      %17 = vector.load %arg3[%c0_14, %c0_15] : memref<8x8xf32, #tpu.memory_space<vmem>>, vector<8x8xf32>
      tpu.vector_store %arg3[%c0_14, %c0_15], %16 {strides = array<i32>} : memref<8x8xf32, #tpu.memory_space<vmem>>, vector<8x8xf32>,
      %cst_16 = arith.constant 0.000000e+00 : f32
      %18 = vector.broadcast %cst_16 : f32 to vector<8x1xf32>
      %c0_17 = arith.constant 0 : index
      %c0_18 = arith.constant 0 : index
      %19 = vector.load %arg4[%c0_17, %c0_18] : memref<8x1xf32, #tpu.memory_space<vmem>>, vector<8x1xf32>
      tpu.vector_store %arg4[%c0_17, %c0_18], %18 {strides = array<i32>} : memref<8x1xf32, #tpu.memory_space<vmem>>, vector<8x1xf32>,
    } else {
    }
    %c0 = arith.constant 0 : index
    %c0_2 = arith.constant 0 : index
    %c0_3 = arith.constant 0 : index
    %5 = vector.load %arg2[%c0, %c0_2, %c0_3] : memref<1x8x32xf32, #tpu.memory_space<vmem>>, vector<1x8x32xf32>
    %6 = vector.shape_cast %5 : vector<1x8x32xf32> to vector<8x32xf32>
    %c0_4 = arith.constant 0 : index
    %c0_5 = arith.constant 0 : index
    %7 = vector.load %arg3[%c0_4, %c0_5] : memref<8x8xf32, #tpu.memory_space<vmem>>, vector<8x8xf32>
    %cst = arith.constant dense<0.000000e+00> : vector<8x8xf32>
    %8 = tpu.matmul %6, %6, %cst {dimension_numbers = #tpu.dot_dimension_numbers<[1], [1], [0], [0], [0, 0, 1, 0], [], []>} : vector<8x32xf32>, vector<8x32xf32>, vector<8x8xf32> -> vector<8x8xf32>
    %9 = arith.addf %7, %8 : vector<8x8xf32>
    %c0_6 = arith.constant 0 : index
    %c0_7 = arith.constant 0 : index
    %10 = vector.load %arg3[%c0_6, %c0_7] : memref<8x8xf32, #tpu.memory_space<vmem>>, vector<8x8xf32>
    tpu.vector_store %arg3[%c0_6, %c0_7], %9 {strides = array<i32>} : memref<8x8xf32, #tpu.memory_space<vmem>>, vector<8x8xf32>,
    %c0_8 = arith.constant 0 : index
    %c0_9 = arith.constant 0 : index
    %11 = vector.load %arg4[%c0_8, %c0_9] : memref<8x1xf32, #tpu.memory_space<vmem>>, vector<8x1xf32>
    %cst_10 = arith.constant dense<0.000000e+00> : vector<8xf32>
    %12 = vector.multi_reduction <add>, %6, %cst_10 [1] : vector<8x32xf32> to vector<8xf32>
    %13 = vector.shape_cast %12 : vector<8xf32> to vector<8x1xf32>
    %14 = arith.addf %11, %13 : vector<8x1xf32>
    %c0_11 = arith.constant 0 : index
    %c0_12 = arith.constant 0 : index
    %15 = vector.load %arg4[%c0_11, %c0_12] : memref<8x1xf32, #tpu.memory_space<vmem>>, vector<8x1xf32>
    tpu.vector_store %arg4[%c0_11, %c0_12], %14 {strides = array<i32>} : memref<8x1xf32, #tpu.memory_space<vmem>>, vector<8x1xf32>,
    return
  }
  func.func @transform_0(%arg0: i32, %arg1: i32) -> (i32, i32, i32) {
    %c0_i32 = arith.constant 0 : i32
    %c0_i32_0 = arith.constant 0 : i32
    return %arg0, %c0_i32, %arg1 : i32, i32, i32
  }
  func.func @transform_1(%arg0: i32, %arg1: i32) -> (i32, i32) {
    %c0_i32 = arith.constant 0 : i32
    %c0_i32_0 = arith.constant 0 : i32
    %c0_i32_1 = arith.constant 0 : i32
    return %c0_i32, %c0_i32_0 : i32, i32
  }
  func.func @transform_2(%arg0: i32, %arg1: i32) -> (i32, i32) {
    %c0_i32 = arith.constant 0 : i32
    %c0_i32_0 = arith.constant 0 : i32
    %c0_i32_1 = arith.constant 0 : i32
    return %c0_i32, %c0_i32_0 : i32, i32
  }
}

</mosaic_0001>

<llo_original>
// kernel: tpu_custom_call.1
$region0: #{tpu_custom_call.1}
  #allocation0 [shape = 'u32[]', space=smem, size = 0x4, offset = 0x4, fixed_abs, tag = 'smem constant byte address 0x4 - core index']
  #allocation1 [shape = 'u32[144,128]{1,0:T(1,128)}', space=vmem, size = 0x12000, scoped, tag = 'internal scratch']
  %s0 = inlined_call_operand.hbm [shape: f32[2,8,32], index: 0, kind: input, shape index: {}]
  %s1 = inlined_call_operand.hbm [shape: f32[8,8], index: 1, kind: output, shape index: {0}]
  %s2 = inlined_call_operand.vmem [shape: f32[8,1], index: 2, kind: output, shape index: {1}]
  %3 = xla_tuple %s1, %s2
  %s4 = sld [smem:[#allocation0]]
  $region53: #{tpu_custom_call.1} parent=0
    _
  %s6 = ssub.s32 1, %s4
  %s7 = scalar_select 0, %s6, %s4
  $region1: #{tpu_custom_call.1} parent=0
    #allocation2 [shape = 'u8[8192]{0}', space=vmem, size = 0x2000, scoped, tag = 'input window, operand 0']
    #allocation3 [shape = 's32[2]{0}', space=sflag, size = 0x8, scoped, tag = 'scoped memory for tpu_custom_call.1']
    #allocation4 [shape = 's32[2]{0}', space=sflag, size = 0x8, scoped, tag = 'scoped memory for tpu_custom_call.1']
    #allocation5 [shape = 'u8[4096]{0}', space=vmem, size = 0x1000, scoped, tag = 'output window, operand 0, single buffered']
    %8 = vsyncpa [#allocation3], 0
    %s9 = scalar_lea.sflag [#allocation3], 1
    %10 = vsyncpa %s9, 0
    %11 = vsyncpa [#allocation4], 0
    loop: start=0, step=1, limit=4
    $region2: #{tpu_custom_call.1} parent=1 // loop_pre_header
      _
    $region3: #{tpu_custom_call.1} parent=1 // loop_header
      %s13 = sphi 0, %s17
      %p14 = scmp.ge.s32.totalorder %s13, 4
      %s20 = sphi 0, %s32
      %s21 = sphi 0, %s28
      %s22 = sphi 0, %s20
      %s23 = sphi 0, %s21
      %s24 = sphi 0, %s22
      %s25 = sphi 0, %s23
      %s37 = sphi 0, %s39
      %s40 = sphi 0, %s37
      %s41 = sphi 0, %s40
      %s57 = sphi 0, %s41
      %s61 = sphi 0, %s61
      %s63 = sphi 0, %s61
      %s64 = sphi 0, %s63
      %s78 = sphi 0, %s64
      %s82 = sphi 0, %s82
      %s84 = sphi 0, %s82
      %s85 = sphi 0, %s84
      %s99 = sphi 0, %s85
    $region4: #{tpu_custom_call.1} parent=1 // loop_header_branch
      %16 = sbr.rel (%p14) target = $region8
    $region5: #{tpu_custom_call.1} parent=1 // loop_body
      %s18 = ssub.s32 %s13, 1
      %s19 = ssub.s32 %s13, 2
      %s26 = sadd.s32 1, %s21
      %p27 = scmp.ge.s32.totalorder %s26, 1
      %s28 = scalar_select %p27, 0, %s26
      %s29 = sadd.s32 1, %s20
      %s30 = scalar_select %p27, %s29, %s20
      %p31 = scmp.ge.s32.totalorder %s30, 2
      %s32 = scalar_select %p31, 0, %s30
      %s33 = ssub.s32 %s20, %s32
      %s34 = ssub.s32 %s21, %s28
      %s35 = sor.u32 %s33, %s34
      %p36 = scmp.eq.s32.totalorder %s35, 0
      %s38 = sadd.s32 %s37, 1
      %s39 = scalar_select %p36, %s37, %s38
      %p42 = pneg %p36
      %p43 = scmp.eq.s32.totalorder %s13, 1
      %p44 = por %p42, %p43
      %p45 = scmp.ne.s32.totalorder %s37, %s40
      %p46 = scmp.eq.s32.totalorder %s13, 0
      %p47 = por %p45, %p46
      %p48 = scmp.ne.s32.totalorder %s37, %s40
      %p49 = scmp.eq.s32.totalorder %s18, 1
      %p50 = por %p48, %p49
      %p51 = scmp.ne.s32.totalorder %s40, %s41
      %p52 = scmp.eq.s32.totalorder %s18, 0
      %p53 = por %p51, %p52
      %p54 = scmp.ne.s32.totalorder %s40, %s41
      %p55 = scmp.eq.s32.totalorder %s19, 1
      %p56 = por %p54, %p55
      %p58 = scmp.ne.s32.totalorder %s41, %s57
      %p59 = scmp.eq.s32.totalorder %s19, 0
      %p60 = por %p58, %p59
      %s62 = sadd.s32 %s61, 1
      %p65 = scmp.eq.s32.totalorder %s13, 1
      %p66 = scmp.ne.s32.totalorder %s61, %s63
      %p67 = scmp.eq.s32.totalorder %s13, 0
      %p68 = por %p66, %p67
      %p69 = scmp.ne.s32.totalorder %s61, %s63
      %p70 = scmp.eq.s32.totalorder %s18, 1
      %p71 = por %p69, %p70
      %p72 = scmp.ne.s32.totalorder %s63, %s64
      %p73 = scmp.eq.s32.totalorder %s18, 0
      %p74 = por %p72, %p73
      %p75 = scmp.ne.s32.totalorder %s63, %s64
      %p76 = scmp.eq.s32.totalorder %s19, 1
      %p77 = por %p75, %p76
      %p79 = scmp.ne.s32.totalorder %s64, %s78
      %p80 = scmp.eq.s32.totalorder %s19, 0
      %p81 = por %p79, %p80
      %s83 = sadd.s32 %s82, 1
      %p86 = scmp.eq.s32.totalorder %s13, 1
      %p87 = scmp.ne.s32.totalorder %s82, %s84
      %p88 = scmp.eq.s32.totalorder %s13, 0
      %p89 = por %p87, %p88
      %p90 = scmp.ne.s32.totalorder %s82, %s84
      %p91 = scmp.eq.s32.totalorder %s18, 1
      %p92 = por %p90, %p91
      %p93 = scmp.ne.s32.totalorder %s84, %s85
      %p94 = scmp.eq.s32.totalorder %s18, 0
      %p95 = por %p93, %p94
      %p96 = scmp.ne.s32.totalorder %s84, %s85
      %p97 = scmp.eq.s32.totalorder %s19, 1
      %p98 = por %p96, %p97
      %p100 = scmp.ne.s32.totalorder %s85, %s99
      %p101 = scmp.eq.s32.totalorder %s19, 0
      %p102 = por %p100, %p101
      %p103 = scmp.le.s32.totalorder 1, %s13
      %p104 = scmp.lt.s32.totalorder %s13, 3
      %p105 = pnand %p103, %p104
      %p106 = pneg %p105
      // Predicated region
      $region9: #{tpu_custom_call.1} parent=5 // pred_check
        _
      $region10: #{tpu_custom_call.1} parent=5 // pred_check_branch
        %108 = sbr.rel (%p105) target = $region12
      $region11: #{tpu_custom_call.1} parent=5 // pred_region
        %s109 = ssub.s32 %s13, 1
      $region12: #{tpu_custom_call.1} parent=5 // pred_fallthru
        _
      %p110 = scmp.lt.s32.totalorder %s13, 2
      // Predicated region
      $region13: #{tpu_custom_call.1} parent=5 // pred_check
        %p111 = pneg %p110
      $region14: #{tpu_custom_call.1} parent=5 // pred_check_branch
        %113 = sbr.rel (%p111) target = $region16
      $region15: #{tpu_custom_call.1} parent=5 // pred_region
        // Predicated region
        $region17: #{tpu_custom_call.1} parent=15 // pred_check
          %p114 = pneg %p47
        $region18: #{tpu_custom_call.1} parent=15 // pred_check_branch
          %116 = sbr.rel (%p114) target = $region20
        $region19: #{tpu_custom_call.1} parent=15 // pred_region
          %s117 = sand.u32 %s37, 1
          %s118 = scalar_lea.sflag [#allocation3], %s117
          %s119 = sand.u32 %s37, 1
          %s120 = smul.addr %s119, 8
          %s121 = scalar_lea.vmem [#allocation2], %s120
          %s123 = ssub.s32 128, 128
          %124 = vsyncadd %s118, %s123
          %s125 = sadd.s32 %s21, %s20
          %s126 = smul.addr %s125, 128
          %s127 = scalar_lea.hbm %s0, %s126
          %s129 = sshll.u32 %s121, 4
          %s130 = int_to_ptr.vmem [resolvable:$true] %s129
          %132 = dma.hbm_to_vmem [thread:$0]  %s127, 128, %s130, %s118
        $region20: #{tpu_custom_call.1} parent=15 // pred_fallthru
          _
      $region16: #{tpu_custom_call.1} parent=5 // pred_fallthru
        _
      %p133 = scmp.le.s32.totalorder 1, %s13
      %p134 = scmp.lt.s32.totalorder %s13, 3
      %p135 = pnand %p133, %p134
      %p136 = pneg %p135
      // Predicated region
      $region21: #{tpu_custom_call.1} parent=5 // pred_check
        _
      $region22: #{tpu_custom_call.1} parent=5 // pred_check_branch
        %138 = sbr.rel (%p135) target = $region24
      $region23: #{tpu_custom_call.1} parent=5 // pred_region
        %s139 = ssub.s32 %s13, 1
        %s140 = sand.u32 %s40, 1
        %s141 = scalar_lea.sflag [#allocation3], %s140
        %s142 = sand.u32 %s40, 1
        %s143 = smul.addr %s142, 8
        %s144 = scalar_lea.vmem [#allocation2], %s143
        // Predicated region
        $region25: #{tpu_custom_call.1} parent=23 // pred_check
          %p145 = pneg %p53
        $region26: #{tpu_custom_call.1} parent=23 // pred_check_branch
          %147 = sbr.rel (%p145) target = $region28
        $region27: #{tpu_custom_call.1} parent=23 // pred_region
          %148 = dma.done %s141, 128
        $region28: #{tpu_custom_call.1} parent=23 // pred_fallthru
          _
        %s149 = sand.u32 %s40, 1
        %s150 = scalar_lea.sflag [#allocation3], %s149
        %s151 = sand.u32 %s40, 1
        %s152 = smul.addr %s151, 8
        %s153 = scalar_lea.vmem [#allocation2], %s152
        %p154 = pneg %p53
        %p155 = pneg %p50
        %p156 = pneg %p74
        %p157 = pneg %p71
        %p158 = pneg %p95
        %p159 = pneg %p92
        %p160 = scmp.eq.s32.totalorder %s22, 0
        %p161 = scmp.eq.s32.totalorder %s23, 0
        %p162 = pnand %p160, %p161
        %p163 = pneg %p162
        // Predicated region
        $region29: #{tpu_custom_call.1} parent=23 // pred_check
          _
        $region30: #{tpu_custom_call.1} parent=23 // pred_check_branch
          %165 = sbr.rel (%p162) target = $region32
        $region31: #{tpu_custom_call.1} parent=23 // pred_region
          %vm166 = vcmask 64512
          %167 = vst.msk [vmem:[#allocation5] sm:$0xff] %vm166, 0.0
          %vm168 = vcmask 7168
          %169 = vst.msk [vmem:[%s2] sm:$0xff] %vm168, 0.0
        $region32: #{tpu_custom_call.1} parent=23 // pred_fallthru
          _
        %v170 = vld [vmem:[%s144] sm:$0xff]
        %v171 = vld [vmem:[#allocation5] sm:$0xff]
        %vm172 = vcmask 261120
        %v174 = vsel %vm172, %v170, 0
        %176 = vmatprep.subr.mxu0 0.0
        %177 = vmatpush1.xpose.msra.mxu0 0.0
        %178 = vmatprep.subr.mxu0 0.0
        %179 = vmatpush1.xpose.msra.mxu0 0.0
        %180 = vmatprep.subr.mxu0 0.0
        %181 = vmatpush1.xpose.msra.mxu0 0.0
        %182 = vmatprep.subr.mxu0 0.0
        %183 = vmatpush1.xpose.msra.mxu0 0.0
        %184 = vmatprep.subr.mxu0 0.0
        %185 = vmatpush1.xpose.msra.mxu0 0.0
        %186 = vmatprep.subr.mxu0 0.0
        %187 = vmatpush1.xpose.msra.mxu0 0.0
        %188 = vmatprep.subr.mxu0 0.0
        %189 = vmatpush1.xpose.msra.mxu0 0.0
        %190 = vmatprep.subr.mxu0 0.0
        %191 = vmatpush1.xpose.msra.mxu0 0.0
        %192 = vmatprep.subr.mxu0 0.0
        %193 = vmatpush1.xpose.msra.mxu0 0.0
        %194 = vmatprep.subr.mxu0 0.0
        %195 = vmatpush1.xpose.msra.mxu0 0.0
        %196 = vmatprep.subr.mxu0 0.0
        %197 = vmatpush1.xpose.msra.mxu0 0.0
        %198 = vmatprep.subr.mxu0 0.0
        %199 = vmatpush1.xpose.msra.mxu0 0.0
        %200 = vmatprep.subr.mxu0 0.0
        %201 = vmatpush1.xpose.msra.mxu0 0.0
        %202 = vmatprep.subr.mxu0 0.0
        %203 = vmatpush1.xpose.msra.mxu0 0.0
        %204 = vmatprep.subr.mxu0 0.0
        %205 = vmatpush1.xpose.msra.mxu0 0.0
        %206 = vmatprep.subr.mxu0 0.0
        %207 = vmatpush1.xpose.msra.mxu0 %v174
        %208 = vmatprep.subr.mxu0 0.0
        %209 = vmatpush2.xpose.msra.mxu0 0.0
        %210 = vmatprep.subr.mxu0 0.0
        %211 = vmatpush2.xpose.msra.mxu0 0.0
        %212 = vmatprep.subr.mxu0 0.0
        %213 = vmatpush2.xpose.msra.mxu0 0.0
        %214 = vmatprep.subr.mxu0 0.0
        %215 = vmatpush2.xpose.msra.mxu0 0.0
        %216 = vmatprep.subr.mxu0 0.0
        %217 = vmatpush2.xpose.msra.mxu0 0.0
        %218 = vmatprep.subr.mxu0 0.0
        %219 = vmatpush2.xpose.msra.mxu0 0.0
        %220 = vmatprep.subr.mxu0 0.0
        %221 = vmatpush2.xpose.msra.mxu0 0.0
        %222 = vmatprep.subr.mxu0 0.0
        %223 = vmatpush2.xpose.msra.mxu0 0.0
        %224 = vmatprep.subr.mxu0 0.0
        %225 = vmatpush2.xpose.msra.mxu0 0.0
        %226 = vmatprep.subr.mxu0 0.0
        %227 = vmatpush2.xpose.msra.mxu0 0.0
        %228 = vmatprep.subr.mxu0 0.0
        %229 = vmatpush2.xpose.msra.mxu0 0.0
        %230 = vmatprep.subr.mxu0 0.0
        %231 = vmatpush2.xpose.msra.mxu0 0.0
        %232 = vmatprep.subr.mxu0 0.0
        %233 = vmatpush2.xpose.msra.mxu0 0.0
        %234 = vmatprep.subr.mxu0 0.0
        %235 = vmatpush2.xpose.msra.mxu0 0.0
        %236 = vmatprep.subr.mxu0 0.0
        %237 = vmatpush2.xpose.msra.mxu0 0.0
        %238 = vmatprep.subr.mxu0 0.0
        %239 = vmatpush2.xpose.msra.mxu0 0.0
        %240 = vmatprep.mubr.f32.mxu0 0.0
        %241 = vmatmul.mubr.f32.gmra.mxu0 %v174
        %v242 = vpop.f32.mrf.mxu0
        %v243 = vadd.f32 0.0, %v242
        %v244 = vpop.f32.mrf.mxu0
        %245 = vdwg.mxu0
        %v246 = vadd.f32 %v171, %v243
        %vm247 = vcmask 64512
        %248 = vst.msk [vmem:[#allocation5] sm:$0xff] %vm247, %v246
        %v249 = vld [vmem:[%s2] sm:$0xff]
        %v250 = vsel %vm172, %v170, 0.0
        %251 = vadd.xlane.f32.xlu0 %v250
        %v252 = vpop.xlane.xlu0 %251
        %v253 = vadd.f32 %v249, %v252
        %vm254 = vcmask 7168
        %255 = vst.msk [vmem:[%s2] sm:$0xff] %vm254, %v253
        // Predicated region
        $region33: #{tpu_custom_call.1} parent=23 // pred_check
          %p256 = pneg %p71
        $region34: #{tpu_custom_call.1} parent=23 // pred_check_branch
          %258 = sbr.rel (%p256) target = $region36
        $region35: #{tpu_custom_call.1} parent=23 // pred_region
          %s260 = ssub.s32 128, 128
          %261 = vsyncadd [#allocation4], %s260
          %s263 = sshll.u32 [#allocation5], 4
          %s264 = int_to_ptr.vmem [resolvable:$true] %s263
          %266 = dma.vmem_to_hbm [thread:$0]  %s264, 128, %s1, [#allocation4]
        $region36: #{tpu_custom_call.1} parent=23 // pred_fallthru
          _
        // Predicated region
        $region37: #{tpu_custom_call.1} parent=23 // pred_check
          %p267 = pneg %p92
        $region38: #{tpu_custom_call.1} parent=23 // pred_check_branch
          %269 = sbr.rel (%p267) target = $region40
        $region39: #{tpu_custom_call.1} parent=23 // pred_region
          _
        $region40: #{tpu_custom_call.1} parent=23 // pred_fallthru
          _
        // Predicated region
        $region41: #{tpu_custom_call.1} parent=23 // pred_check
          %p270 = pneg %p71
        $region42: #{tpu_custom_call.1} parent=23 // pred_check_branch
          %272 = sbr.rel (%p270) target = $region44
        $region43: #{tpu_custom_call.1} parent=23 // pred_region
          %273 = dma.done [#allocation4], 128
        $region44: #{tpu_custom_call.1} parent=23 // pred_fallthru
          _
        // Predicated region
        $region45: #{tpu_custom_call.1} parent=23 // pred_check
          %p274 = pneg %p92
        $region46: #{tpu_custom_call.1} parent=23 // pred_check_branch
          %276 = sbr.rel (%p274) target = $region48
        $region47: #{tpu_custom_call.1} parent=23 // pred_region
          _
        $region48: #{tpu_custom_call.1} parent=23 // pred_fallthru
          _
      $region24: #{tpu_custom_call.1} parent=5 // pred_fallthru
        _
      %p277 = scmp.le.s32.totalorder 2, %s13
      // Predicated region
      $region49: #{tpu_custom_call.1} parent=5 // pred_check
        %p278 = pneg %p277
      $region50: #{tpu_custom_call.1} parent=5 // pred_check_branch
        %280 = sbr.rel (%p278) target = $region52
      $region51: #{tpu_custom_call.1} parent=5 // pred_region
        %s281 = ssub.s32 %s13, 2
      $region52: #{tpu_custom_call.1} parent=5 // pred_fallthru
        _
    $region6: #{tpu_custom_call.1} parent=1 // loop_footer
      %s17 = sadd.s32 1, %s13
    $region7: #{tpu_custom_call.1} parent=1 // loop_footer_branch
      %12 = sbr.rel target = $region3
    $region8: #{tpu_custom_call.1} parent=1 // loop_exit
      _
    %282 = vsyncpa [#allocation3], 1
    %s283 = scalar_lea.sflag [#allocation3], 1
    %284 = vsyncpa %s283, 1
    %285 = vsyncpa [#allocation4], 1
    %s286 = scalar_lea.sflag [#allocation4], 1
    %287 = vsyncpa %s286, 1

</llo_original>
